<compile_context>
chip_gen: v7x
topology: tpu7x:2x2x1
jax: 0.10.0
libtpu: 0.0.40
codegen_flags: <defaults>
</compile_context>

<pallas_src>
import jax
import jax.numpy as jnp
from jax import lax
from jax.experimental import pallas as pl
from jax.experimental.pallas import tpu as pltpu


# ---------------------------------------------------------------------------
# Kernels — one batch row per grid step (batch axis marked "parallel")
# ---------------------------------------------------------------------------

def _self_attn_kernel(x_ref, m_ref, w_ref, b_ref, o_ref):
    """SelfAttnAggregator forward for one batch row.

    x_ref: [S, D]  VMEM (native dtype)     m_ref: [1, S]  VMEM (f32)
    w_ref: [1, D]  VMEM                    b_ref: [1, 1]  VMEM
    o_ref: [1, D]  VMEM
    """
    x = x_ref[...]                                       # [S, D], native dtype
    m = m_ref[...].astype(jnp.float32)                   # [1, S]
    w = w_ref[...].astype(x.dtype)                       # [1, D]

    # attn logits = x @ W^T + b  ->  [1, S]   (MXU, f32 accumulation)
    logits = lax.dot_general(
        w, x, (((1,), (1,)), ((), ())),
        preferred_element_type=jnp.float32)              # [1, S]
    logits = logits + b_ref[...].astype(jnp.float32)     # broadcast [1, 1]

    # allennlp-style masked_softmax (matches the torch reference):
    #   p = softmax(logits * mask); p = p * mask; p = p / (p.sum(-1) + 1e-13)
    z = logits * m
    z = z - jnp.max(z, axis=-1, keepdims=True)
    e = jnp.exp(z)
    p = e * pl.reciprocal(jnp.sum(e, axis=-1, keepdims=True), approx=True)
    p = p * m
    p = p * pl.reciprocal(jnp.sum(p, axis=-1, keepdims=True) + 1e-13, approx=True)

    # weighted sum: [1, S] @ [S, D] -> [1, D]   (MXU, f32 accumulation)
    pooled = lax.dot_general(
        p.astype(x.dtype), x, (((1,), (0,)), ((), ())),
        preferred_element_type=jnp.float32)
    o_ref[...] = pooled.astype(o_ref.dtype)


def _max_pool_kernel(x_ref, m_ref, o_ref):
    """MaxPoolerAggregator: masked positions -> -1e7, max over seq.

    x_ref: [S, D]   m_ref: [S, 1]   o_ref: [1, D]
    """
    x = x_ref[...]                                       # native dtype
    m = m_ref[...]                                       # [S, 1]
    neg = jnp.asarray(-1e7, dtype=x.dtype)               # scalar splat (no full_like)
    x = jnp.where(m > 0, x, neg)                         # lane-broadcast of [S, 1]
    o_ref[...] = jnp.max(x, axis=0, keepdims=True).astype(o_ref.dtype)


def _avg_pool_kernel(x_ref, m_ref, o_ref):
    """AvgPoolerAggregator: zero masked values, mean over the FULL seq length.

    Implemented as (mask / S) @ x on the MXU with f32 accumulation — no [S, D]
    f32 temporary, no XLU reduce over S.
    x_ref: [S, D]   m_ref: [1, S]   o_ref: [1, D]
    """
    x = x_ref[...]
    inv_s = 1.0 / x.shape[0]
    m = (m_ref[...] * inv_s).astype(x.dtype)             # [1, S]
    pooled = lax.dot_general(
        m, x, (((1,), (0,)), ((), ())),
        preferred_element_type=jnp.float32)              # [1, D]
    o_ref[...] = pooled.astype(o_ref.dtype)


# ---------------------------------------------------------------------------
# Wrappers (pallas_call plumbing)
# ---------------------------------------------------------------------------

def _mosaic_params(*tile_nbytes):
    """Parallel batch axis + explicit VMEM budget (double-buffered tiles + headroom),
    clamped so the same kernel stays within v7x's 64 MiB physical VMEM."""
    need = 2 * sum(int(n) for n in tile_nbytes) + (2 << 20)
    return pltpu.CompilerParams(
        dimension_semantics=("parallel",),
        vmem_limit_bytes=int(min(max(need, 8 << 20), 48 << 20)),
    )


@jax.jit
def self_attn_aggregator(x, mask, w, b):
    B, S, D = x.shape
    mask_r = mask.reshape(B, 1, S).astype(jnp.float32)
    b_r = b.reshape(1, 1).astype(jnp.float32)
    itemsize = jnp.dtype(x.dtype).itemsize
    out = pl.pallas_call(
        _self_attn_kernel,
        grid=(B,),
        in_specs=[
            pl.BlockSpec((None, S, D), lambda i: (i, 0, 0)),   # x -> [S, D]
            pl.BlockSpec((None, 1, S), lambda i: (i, 0, 0)),   # mask -> [1, S]
            pl.BlockSpec((1, D), lambda i: (0, 0)),            # attn weight
            pl.BlockSpec((1, 1), lambda i: (0, 0)),            # attn bias
        ],
        out_specs=pl.BlockSpec((None, 1, D), lambda i: (i, 0, 0)),
        out_shape=jax.ShapeDtypeStruct((B, 1, D), x.dtype),
        compiler_params=_mosaic_params(S * D * itemsize, D * itemsize),
    )(x, mask_r, w, b_r)
    return out.reshape(B, D)


@jax.jit
def max_pool_aggregator(x, mask):
    B, S, D = x.shape
    mask_r = mask.reshape(B, S, 1).astype(jnp.float32)
    itemsize = jnp.dtype(x.dtype).itemsize
    out = pl.pallas_call(
        _max_pool_kernel,
        grid=(B,),
        in_specs=[
            pl.BlockSpec((None, S, D), lambda i: (i, 0, 0)),   # x -> [S, D]
            pl.BlockSpec((None, S, 1), lambda i: (i, 0, 0)),   # mask -> [S, 1]
        ],
        out_specs=pl.BlockSpec((None, 1, D), lambda i: (i, 0, 0)),
        out_shape=jax.ShapeDtypeStruct((B, 1, D), x.dtype),
        compiler_params=_mosaic_params(S * D * itemsize),
    )(x, mask_r)
    return out.reshape(B, D)


@jax.jit
def avg_pool_aggregator(x, mask):
    B, S, D = x.shape
    mask_r = mask.reshape(B, 1, S).astype(jnp.float32)
    itemsize = jnp.dtype(x.dtype).itemsize
    out = pl.pallas_call(
        _avg_pool_kernel,
        grid=(B,),
        in_specs=[
            pl.BlockSpec((None, S, D), lambda i: (i, 0, 0)),   # x -> [S, D]
            pl.BlockSpec((None, 1, S), lambda i: (i, 0, 0)),   # mask -> [1, S]
        ],
        out_specs=pl.BlockSpec((None, 1, D), lambda i: (i, 0, 0)),
        out_shape=jax.ShapeDtypeStruct((B, 1, D), x.dtype),
        compiler_params=_mosaic_params(S * D * itemsize),
    )(x, mask_r)
    return out.reshape(B, D)


class AggregatorLayer:
    """JAX/Pallas mirror of the PyTorch AggregatorLayer dispatch."""

    def __init__(self, hidden_dim, aggregator_name=None, key=None):
        self.d_model = hidden_dim
        self.aggregator_op_name = aggregator_name
        self.params = {}
        if aggregator_name == "slf_attn_pooler":
            # nn.Linear(d_model, 1): weight [1, d_model], bias [1]
            key = key if key is not None else jax.random.PRNGKey(42)
            kw, kb = jax.random.split(key)
            bound = 1.0 / (hidden_dim ** 0.5)
            self.params["attn_w"] = jax.random.uniform(
                kw, (1, hidden_dim), jnp.float32, minval=-bound, maxval=bound)
            self.params["attn_b"] = jax.random.uniform(
                kb, (1,), jnp.float32, minval=-bound, maxval=bound)
        elif aggregator_name == "dr_pooler":
            # TODO(synk): DynamicRoutingAggregator (capsule routing + squash) not implemented.
            raise NotImplementedError("dr_pooler not translated to Pallas")

    def __call__(self, input_tensors, mask=None):
        B, S, _ = input_tensors.shape
        if mask is None:
            mask = jnp.ones((B, S), dtype=jnp.float32)
        mask = mask.astype(jnp.float32)
        if self.aggregator_op_name == "slf_attn_pooler":
            return self_attn_aggregator(
                input_tensors, mask, self.params["attn_w"], self.params["attn_b"])
        elif self.aggregator_op_name == "max_pooler":
            return max_pool_aggregator(input_tensors, mask)
        else:  # default: avg pooler
            return avg_pool_aggregator(input_tensors, mask)


# ---------------------------------------------------------------------------
# Pure-JAX references (for correctness check)
# ---------------------------------------------------------------------------

def _ref_self_attn(x, mask, w, b):
    logits = jnp.einsum("bsd,od->bs", x, w) + b[0]
    z = logits * mask
    p = jax.nn.softmax(z, axis=-1) * mask
    p = p / (jnp.sum(p, axis=-1, keepdims=True) + 1e-13)
    return jnp.einsum("bs,bsd->bd", p, x)


def _ref_max(x, mask):
    x = jnp.where(mask[:, :, None] > 0, x, -1e7)
    return jnp.max(x, axis=1)


def _ref_avg(x, mask):
    return jnp.mean(x * mask[:, :, None], axis=1)


# ---------------------------------------------------------------------------
# Main
# ---------------------------------------------------------------------------

if __name__ == "__main__":
    B, S, D = 2, 8, 32
    key = jax.random.PRNGKey(0)
    kx, _ = jax.random.split(key)
    x = jax.random.normal(kx, (B, S, D), dtype=jnp.float32)
    # deterministic mask: first batch keeps 5 tokens, second keeps all 8
    lengths = jnp.array([5, 8], dtype=jnp.int32)
    mask = (jnp.arange(S)[None, :] < lengths[:, None]).astype(jnp.float32)

    # self-attention pooler (approx reciprocals in-kernel -> slightly looser tol)
    layer_attn = AggregatorLayer(D, "slf_attn_pooler", key=jax.random.PRNGKey(42))
    out_attn = jax.block_until_ready(layer_attn(x, mask))
    ref_attn = _ref_self_attn(x, mask, layer_attn.params["attn_w"], layer_attn.params["attn_b"])
    assert out_attn.shape == (B, D)
    assert jnp.allclose(out_attn, ref_attn, atol=2e-3, rtol=2e-3)

    # max pooler
    layer_max = AggregatorLayer(D, "max_pooler")
    out_max = jax.block_until_ready(layer_max(x, mask))
    assert out_max.shape == (B, D)
    assert jnp.allclose(out_max, _ref_max(x, mask), atol=1e-5, rtol=1e-5)

    # default (avg pooler)
    layer_avg = AggregatorLayer(D, None)
    out_avg = jax.block_until_ready(layer_avg(x, mask))
    assert out_avg.shape == (B, D)
    assert jnp.allclose(out_avg, _ref_avg(x, mask), atol=1e-5, rtol=1e-5)

    print("KERNEL_OK")
</pallas_src>

<mosaic_0001>
module attributes {stable_mosaic.version = 11 : i64} {
  func.func @_self_attn_kernel(%arg0: i32, %arg1: memref<1x8x32xf32, #tpu.memory_space<vmem>>, %arg2: memref<1x1x8xf32, #tpu.memory_space<vmem>>, %arg3: memref<1x32xf32, #tpu.memory_space<vmem>>, %arg4: memref<1x1xf32, #tpu.memory_space<vmem>>, %arg5: memref<1x1x32xf32, #tpu.memory_space<vmem>>) attributes {dimension_semantics = [#tpu.dimension_semantics<parallel>], iteration_bounds = array<i64: 2>, scalar_prefetch = 0 : i64, scratch_operands = 0 : i64, tpu.core_type = #tpu.core_type<tc>, window_params = [{transform_indices = @transform_0, window_bounds = array<i64: 1, 8, 32>}, {transform_indices = @transform_1, window_bounds = array<i64: 1, 1, 8>}, {pipeline_mode = #tpu.pipeline_mode<synchronous>, transform_indices = @transform_2, window_bounds = array<i64: 1, 32>}, {pipeline_mode = #tpu.pipeline_mode<synchronous>, transform_indices = @transform_3, window_bounds = array<i64: 1, 1>}, {transform_indices = @transform_4, window_bounds = array<i64: 1, 1, 32>}]} {
    %c0 = arith.constant 0 : index
    %c0_0 = arith.constant 0 : index
    %c0_1 = arith.constant 0 : index
    %0 = vector.load %arg1[%c0, %c0_0, %c0_1] : memref<1x8x32xf32, #tpu.memory_space<vmem>>, vector<1x8x32xf32>
    %1 = vector.shape_cast %0 : vector<1x8x32xf32> to vector<8x32xf32>
    %c0_2 = arith.constant 0 : index
    %c0_3 = arith.constant 0 : index
    %c0_4 = arith.constant 0 : index
    %2 = vector.load %arg2[%c0_2, %c0_3, %c0_4] : memref<1x1x8xf32, #tpu.memory_space<vmem>>, vector<1x1x8xf32>
    %3 = vector.shape_cast %2 : vector<1x1x8xf32> to vector<1x8xf32>
    %c0_5 = arith.constant 0 : index
    %c0_6 = arith.constant 0 : index
    %4 = vector.load %arg3[%c0_5, %c0_6] : memref<1x32xf32, #tpu.memory_space<vmem>>, vector<1x32xf32>
    %cst = arith.constant dense<0.000000e+00> : vector<1x8xf32>
    %5 = tpu.matmul %4, %1, %cst {dimension_numbers = #tpu.dot_dimension_numbers<[1], [1], [0], [0], [0, 0, 1, 0], [], []>} : vector<1x32xf32>, vector<8x32xf32>, vector<1x8xf32> -> vector<1x8xf32>
    %c0_7 = arith.constant 0 : index
    %c0_8 = arith.constant 0 : index
    %6 = vector.load %arg4[%c0_7, %c0_8] : memref<1x1xf32, #tpu.memory_space<vmem>>, vector<1x1xf32>
    %7 = vector.broadcast %6 : vector<1x1xf32> to vector<1x8xf32>
    %8 = arith.addf %5, %7 : vector<1x8xf32>
    %9 = arith.mulf %8, %3 : vector<1x8xf32>
    %cst_9 = arith.constant dense<0xFF800000> : vector<1xf32>
    %10 = vector.multi_reduction <maximumf>, %9, %cst_9 [1] : vector<1x8xf32> to vector<1xf32>
    %11 = vector.shape_cast %10 : vector<1xf32> to vector<1x1xf32>
    %12 = vector.broadcast %11 : vector<1x1xf32> to vector<1x8xf32>
    %13 = arith.subf %9, %12 : vector<1x8xf32>
    %14 = math.exp %13 : vector<1x8xf32>
    %cst_10 = arith.constant dense<0.000000e+00> : vector<1xf32>
    %15 = vector.multi_reduction <add>, %14, %cst_10 [1] : vector<1x8xf32> to vector<1xf32>
    %16 = vector.shape_cast %15 : vector<1xf32> to vector<1x1xf32>
    %17 = tpu.reciprocal %16 {approx = true} : vector<1x1xf32> -> vector<1x1xf32>
    %18 = vector.broadcast %17 : vector<1x1xf32> to vector<1x8xf32>
    %19 = arith.mulf %14, %18 : vector<1x8xf32>
    %20 = arith.mulf %19, %3 : vector<1x8xf32>
    %cst_11 = arith.constant dense<0.000000e+00> : vector<1xf32>
    %21 = vector.multi_reduction <add>, %20, %cst_11 [1] : vector<1x8xf32> to vector<1xf32>
    %22 = vector.shape_cast %21 : vector<1xf32> to vector<1x1xf32>
    %cst_12 = arith.constant 9.99999982E-14 : f32
    %23 = vector.broadcast %cst_12 : f32 to vector<1x1xf32>
    %24 = arith.addf %22, %23 : vector<1x1xf32>
    %25 = tpu.reciprocal %24 {approx = true} : vector<1x1xf32> -> vector<1x1xf32>
    %26 = vector.broadcast %25 : vector<1x1xf32> to vector<1x8xf32>
    %27 = arith.mulf %20, %26 : vector<1x8xf32>
    %cst_13 = arith.constant dense<0.000000e+00> : vector<1x32xf32>
    %28 = tpu.matmul %27, %1, %cst_13 {dimension_numbers = #tpu.dot_dimension_numbers<[1], [0], [0], [1], [0, 0, 1, 1], [], []>} : vector<1x8xf32>, vector<8x32xf32>, vector<1x32xf32> -> vector<1x32xf32>
    %c0_14 = arith.constant 0 : index
    %c0_15 = arith.constant 0 : index
    %c0_16 = arith.constant 0 : index
    %29 = vector.load %arg5[%c0_14, %c0_15, %c0_16] : memref<1x1x32xf32, #tpu.memory_space<vmem>>, vector<1x1x32xf32>
    %30 = vector.shape_cast %29 : vector<1x1x32xf32> to vector<1x32xf32>
    %31 = vector.shape_cast %28 : vector<1x32xf32> to vector<1x1x32xf32>
    tpu.vector_store %arg5[%c0_14, %c0_15, %c0_16], %31 {strides = array<i32>} : memref<1x1x32xf32, #tpu.memory_space<vmem>>, vector<1x1x32xf32>,
    return
  }
  func.func @transform_0(%arg0: i32) -> (i32, i32, i32) {
    %c0_i32 = arith.constant 0 : i32
    %c0_i32_0 = arith.constant 0 : i32
    %c0_i32_1 = arith.constant 0 : i32
    return %arg0, %c0_i32, %c0_i32_0 : i32, i32, i32
  }
  func.func @transform_1(%arg0: i32) -> (i32, i32, i32) {
    %c0_i32 = arith.constant 0 : i32
    %c0_i32_0 = arith.constant 0 : i32
    %c0_i32_1 = arith.constant 0 : i32
    return %arg0, %c0_i32, %c0_i32_0 : i32, i32, i32
  }
  func.func @transform_2(%arg0: i32) -> (i32, i32) {
    %c0_i32 = arith.constant 0 : i32
    %c0_i32_0 = arith.constant 0 : i32
    %c0_i32_1 = arith.constant 0 : i32
    return %c0_i32, %c0_i32_0 : i32, i32
  }
  func.func @transform_3(%arg0: i32) -> (i32, i32) {
    %c0_i32 = arith.constant 0 : i32
    %c0_i32_0 = arith.constant 0 : i32
    %c0_i32_1 = arith.constant 0 : i32
    return %c0_i32, %c0_i32_0 : i32, i32
  }
  func.func @transform_4(%arg0: i32) -> (i32, i32, i32) {
    %c0_i32 = arith.constant 0 : i32
    %c0_i32_0 = arith.constant 0 : i32
    %c0_i32_1 = arith.constant 0 : i32
    return %arg0, %c0_i32, %c0_i32_0 : i32, i32, i32
  }
}

</mosaic_0001>

<llo_original>
// kernel: self_attn_aggregator.1
$region0: #{self_attn_aggregator.1}
  #allocation0 [shape = 'u32[]', space=smem, size = 0x4, offset = 0x4, fixed_abs, tag = 'smem constant byte address 0x4 - core index']
  #allocation1 [shape = 'u32[144,128]{1,0:T(1,128)}', space=vmem, size = 0x12000, scoped, tag = 'internal scratch']
  #allocation2 [shape = 'f32[1,1]{1,0:T(1,128)S(1)}', space=vmem, size = 0x200, scoped, tag = 'scoped memory for self_attn_aggregator.1']
  %s0 = inlined_call_operand.hbm [shape: f32[2,8,32], index: 0, kind: input, shape index: {}]
  %s1 = inlined_call_operand.vmem [shape: f32[2,1,8], index: 1, kind: input, shape index: {}]
  %s2 = inlined_call_operand.vmem [shape: f32[1,32], index: 2, kind: input, shape index: {}]
  %s3 = inlined_call_operand.<no memory space> [shape: f32[1,1], index: 3, kind: input, shape index: {}]
  %s4 = inlined_call_operand.hbm [shape: f32[2,1,32], index: 4, kind: output, shape index: {}]
  %s5 = sld [smem:[#allocation0]]
  $region53: #{self_attn_aggregator.1} parent=0
    _
  %s7 = ssub.s32 1, %s5
  %s8 = scalar_select 0, %s7, %s5
  %v9 = vstv %s3
  %10 = vst [vmem:[#allocation2] sm:$0x1] %v9
  $region1: #{self_attn_aggregator.1} parent=0
    #allocation3 [shape = 'u8[8192]{0}', space=vmem, size = 0x2000, scoped, tag = 'input window, operand 0']
    #allocation4 [shape = 's32[2]{0}', space=sflag, size = 0x8, scoped, tag = 'scoped memory for self_attn_aggregator.1']
    #allocation5 [shape = 's32[2]{0}', space=sflag, size = 0x8, scoped, tag = 'scoped memory for self_attn_aggregator.1']
    #allocation6 [shape = 'u8[1024]{0}', space=vmem, size = 0x400, scoped, tag = 'output window, operand 0']
    %11 = vsyncpa [#allocation4], 0
    %s12 = scalar_lea.sflag [#allocation4], 1
    %13 = vsyncpa %s12, 0
    %14 = vsyncpa [#allocation5], 0
    %s15 = scalar_lea.sflag [#allocation5], 1
    %16 = vsyncpa %s15, 0
    loop: start=0, step=1, limit=4
    $region2: #{self_attn_aggregator.1} parent=1 // loop_pre_header
      _
    $region3: #{self_attn_aggregator.1} parent=1 // loop_header
      %s18 = sphi 0, %s22
      %p19 = scmp.ge.s32.totalorder %s18, 4
      %s28 = sphi 0, %s30
      %s31 = sphi 0, %s28
      %s32 = sphi 0, %s31
      %s48 = sphi 0, %s32
      %s54 = sphi 0, %s56
      %s57 = sphi 0, %s54
      %s58 = sphi 0, %s57
      %s74 = sphi 0, %s58
      %s78 = sphi 0, %s78
      %s80 = sphi 0, %s78
      %s81 = sphi 0, %s80
      %s95 = sphi 0, %s81
      %s99 = sphi 0, %s99
      %s101 = sphi 0, %s99
      %s102 = sphi 0, %s101
      %s116 = sphi 0, %s102
      %s122 = sphi 0, %s124
      %s125 = sphi 0, %s122
      %s126 = sphi 0, %s125
      %s142 = sphi 0, %s126
    $region4: #{self_attn_aggregator.1} parent=1 // loop_header_branch
      %21 = sbr.rel (%p19) target = $region8
    $region5: #{self_attn_aggregator.1} parent=1 // loop_body
      %s23 = ssub.s32 %s18, 1
      %s24 = ssub.s32 %s18, 2
      %s25 = sadd.s32 %s18, 1
      %s26 = ssub.s32 %s18, %s25
      %p27 = scmp.eq.s32.totalorder %s26, 0
      %s29 = sadd.s32 %s28, 1
      %s30 = scalar_select %p27, %s28, %s29
      %p33 = pneg %p27
      %p34 = scmp.eq.s32.totalorder %s18, 1
      %p35 = por %p33, %p34
      %p36 = scmp.ne.s32.totalorder %s28, %s31
      %p37 = scmp.eq.s32.totalorder %s18, 0
      %p38 = por %p36, %p37
      %p39 = scmp.ne.s32.totalorder %s28, %s31
      %p40 = scmp.eq.s32.totalorder %s23, 1
      %p41 = por %p39, %p40
      %p42 = scmp.ne.s32.totalorder %s31, %s32
      %p43 = scmp.eq.s32.totalorder %s23, 0
      %p44 = por %p42, %p43
      %p45 = scmp.ne.s32.totalorder %s31, %s32
      %p46 = scmp.eq.s32.totalorder %s24, 1
      %p47 = por %p45, %p46
      %p49 = scmp.ne.s32.totalorder %s32, %s48
      %p50 = scmp.eq.s32.totalorder %s24, 0
      %p51 = por %p49, %p50
      %s52 = ssub.s32 %s18, %s25
      %p53 = scmp.eq.s32.totalorder %s52, 0
      %s55 = sadd.s32 %s54, 1
      %s56 = scalar_select %p53, %s54, %s55
      %p59 = pneg %p53
      %p60 = scmp.eq.s32.totalorder %s18, 1
      %p61 = por %p59, %p60
      %p62 = scmp.ne.s32.totalorder %s54, %s57
      %p63 = scmp.eq.s32.totalorder %s18, 0
      %p64 = por %p62, %p63
      %p65 = scmp.ne.s32.totalorder %s54, %s57
      %p66 = scmp.eq.s32.totalorder %s23, 1
      %p67 = por %p65, %p66
      %p68 = scmp.ne.s32.totalorder %s57, %s58
      %p69 = scmp.eq.s32.totalorder %s23, 0
      %p70 = por %p68, %p69
      %p71 = scmp.ne.s32.totalorder %s57, %s58
      %p72 = scmp.eq.s32.totalorder %s24, 1
      %p73 = por %p71, %p72
      %p75 = scmp.ne.s32.totalorder %s58, %s74
      %p76 = scmp.eq.s32.totalorder %s24, 0
      %p77 = por %p75, %p76
      %s79 = sadd.s32 %s78, 1
      %p82 = scmp.eq.s32.totalorder %s18, 1
      %p83 = scmp.ne.s32.totalorder %s78, %s80
      %p84 = scmp.eq.s32.totalorder %s18, 0
      %p85 = por %p83, %p84
      %p86 = scmp.ne.s32.totalorder %s78, %s80
      %p87 = scmp.eq.s32.totalorder %s23, 1
      %p88 = por %p86, %p87
      %p89 = scmp.ne.s32.totalorder %s80, %s81
      %p90 = scmp.eq.s32.totalorder %s23, 0
      %p91 = por %p89, %p90
      %p92 = scmp.ne.s32.totalorder %s80, %s81
      %p93 = scmp.eq.s32.totalorder %s24, 1
      %p94 = por %p92, %p93
      %p96 = scmp.ne.s32.totalorder %s81, %s95
      %p97 = scmp.eq.s32.totalorder %s24, 0
      %p98 = por %p96, %p97
      %s100 = sadd.s32 %s99, 1
      %p103 = scmp.eq.s32.totalorder %s18, 1
      %p104 = scmp.ne.s32.totalorder %s99, %s101
      %p105 = scmp.eq.s32.totalorder %s18, 0
      %p106 = por %p104, %p105
      %p107 = scmp.ne.s32.totalorder %s99, %s101
      %p108 = scmp.eq.s32.totalorder %s23, 1
      %p109 = por %p107, %p108
      %p110 = scmp.ne.s32.totalorder %s101, %s102
      %p111 = scmp.eq.s32.totalorder %s23, 0
      %p112 = por %p110, %p111
      %p113 = scmp.ne.s32.totalorder %s101, %s102
      %p114 = scmp.eq.s32.totalorder %s24, 1
      %p115 = por %p113, %p114
      %p117 = scmp.ne.s32.totalorder %s102, %s116
      %p118 = scmp.eq.s32.totalorder %s24, 0
      %p119 = por %p117, %p118
      %s120 = ssub.s32 %s18, %s25
      %p121 = scmp.eq.s32.totalorder %s120, 0
      %s123 = sadd.s32 %s122, 1
      %s124 = scalar_select %p121, %s122, %s123
      %p127 = pneg %p121
      %p128 = scmp.eq.s32.totalorder %s18, 1
      %p129 = por %p127, %p128
      %p130 = scmp.ne.s32.totalorder %s122, %s125
      %p131 = scmp.eq.s32.totalorder %s18, 0
      %p132 = por %p130, %p131
      %p133 = scmp.ne.s32.totalorder %s122, %s125
      %p134 = scmp.eq.s32.totalorder %s23, 1
      %p135 = por %p133, %p134
      %p136 = scmp.ne.s32.totalorder %s125, %s126
      %p137 = scmp.eq.s32.totalorder %s23, 0
      %p138 = por %p136, %p137
      %p139 = scmp.ne.s32.totalorder %s125, %s126
      %p140 = scmp.eq.s32.totalorder %s24, 1
      %p141 = por %p139, %p140
      %p143 = scmp.ne.s32.totalorder %s126, %s142
      %p144 = scmp.eq.s32.totalorder %s24, 0
      %p145 = por %p143, %p144
      %p146 = scmp.le.s32.totalorder 1, %s18
      %p147 = scmp.lt.s32.totalorder %s18, 3
      %p148 = pnand %p146, %p147
      %p149 = pneg %p148
      // Predicated region
      $region9: #{self_attn_aggregator.1} parent=5 // pred_check
        _
      $region10: #{self_attn_aggregator.1} parent=5 // pred_check_branch
        %151 = sbr.rel (%p148) target = $region12
      $region11: #{self_attn_aggregator.1} parent=5 // pred_region
        %s152 = ssub.s32 %s18, 1
        // Predicated region
        $region13: #{self_attn_aggregator.1} parent=11 // pred_check
          %p153 = pneg %p91
        $region14: #{self_attn_aggregator.1} parent=11 // pred_check_branch
          %155 = sbr.rel (%p153) target = $region16
        $region15: #{self_attn_aggregator.1} parent=11 // pred_region
          _
        $region16: #{self_attn_aggregator.1} parent=11 // pred_fallthru
          _
        // Predicated region
        $region17: #{self_attn_aggregator.1} parent=11 // pred_check
          %p156 = pneg %p112
        $region18: #{self_attn_aggregator.1} parent=11 // pred_check_branch
          %158 = sbr.rel (%p156) target = $region20
        $region19: #{self_attn_aggregator.1} parent=11 // pred_region
          _
        $region20: #{self_attn_aggregator.1} parent=11 // pred_fallthru
          _
      $region12: #{self_attn_aggregator.1} parent=5 // pred_fallthru
        _
      %p159 = scmp.lt.s32.totalorder %s18, 2
      // Predicated region
      $region21: #{self_attn_aggregator.1} parent=5 // pred_check
        %p160 = pneg %p159
      $region22: #{self_attn_aggregator.1} parent=5 // pred_check_branch
        %162 = sbr.rel (%p160) target = $region24
      $region23: #{self_attn_aggregator.1} parent=5 // pred_region
        // Predicated region
        $region25: #{self_attn_aggregator.1} parent=23 // pred_check
          %p163 = pneg %p38
        $region26: #{self_attn_aggregator.1} parent=23 // pred_check_branch
          %165 = sbr.rel (%p163) target = $region28
        $region27: #{self_attn_aggregator.1} parent=23 // pred_region
          %s166 = sand.u32 %s28, 1
          %s167 = scalar_lea.sflag [#allocation4], %s166
          %s168 = sand.u32 %s28, 1
          %s169 = smul.addr %s168, 8
          %s170 = scalar_lea.vmem [#allocation3], %s169
          %s172 = ssub.s32 128, 128
          %173 = vsyncadd %s167, %s172
          %s174 = smul.addr %s18, 128
          %s175 = scalar_lea.hbm %s0, %s174
          %s177 = sshll.u32 %s170, 4
          %s178 = int_to_ptr.vmem [resolvable:$true] %s177
          %180 = dma.hbm_to_vmem [thread:$0]  %s175, 128, %s178, %s167
        $region28: #{self_attn_aggregator.1} parent=23 // pred_fallthru
          _
        // Predicated region
        $region29: #{self_attn_aggregator.1} parent=23 // pred_check
          %p181 = pneg %p64
        $region30: #{self_attn_aggregator.1} parent=23 // pred_check_branch
          %183 = sbr.rel (%p181) target = $region32
        $region31: #{self_attn_aggregator.1} parent=23 // pred_region
          %p184 = scmp.lt.s32.totalorder %s18, 1
          %s185 = scalar_select %p184, %s18, 1
          %s186 = scalar_lea.vmem %s1, %s185
        $region32: #{self_attn_aggregator.1} parent=23 // pred_fallthru
          _
      $region24: #{self_attn_aggregator.1} parent=5 // pred_fallthru
        _
      %p187 = scmp.le.s32.totalorder 1, %s18
      %p188 = scmp.lt.s32.totalorder %s18, 3
      %p189 = pnand %p187, %p188
      %p190 = pneg %p189
      // Predicated region
      $region33: #{self_attn_aggregator.1} parent=5 // pred_check
        _
      $region34: #{self_attn_aggregator.1} parent=5 // pred_check_branch
        %192 = sbr.rel (%p189) target = $region36
      $region35: #{self_attn_aggregator.1} parent=5 // pred_region
        %s193 = ssub.s32 %s18, 1
        %s194 = sand.u32 %s31, 1
        %s195 = scalar_lea.sflag [#allocation4], %s194
        %s196 = sand.u32 %s31, 1
        %s197 = smul.addr %s196, 8
        %s198 = scalar_lea.vmem [#allocation3], %s197
        // Predicated region
        $region37: #{self_attn_aggregator.1} parent=35 // pred_check
          %p199 = pneg %p44
        $region38: #{self_attn_aggregator.1} parent=35 // pred_check_branch
          %201 = sbr.rel (%p199) target = $region40
        $region39: #{self_attn_aggregator.1} parent=35 // pred_region
          %202 = dma.done %s195, 128
        $region40: #{self_attn_aggregator.1} parent=35 // pred_fallthru
          _
        %s203 = sand.u32 %s31, 1
        %s204 = scalar_lea.sflag [#allocation4], %s203
        %s205 = sand.u32 %s31, 1
        %s206 = smul.addr %s205, 8
        %s207 = scalar_lea.vmem [#allocation3], %s206
        %p208 = pneg %p44
        %p209 = pneg %p41
        %p210 = scmp.lt.s32.totalorder %s23, 1
        %s211 = scalar_select %p210, %s23, 1
        %s212 = scalar_lea.vmem %s1, %s211
        %p213 = pneg %p70
        %p214 = pneg %p67
        %p215 = pneg %p91
        %p216 = pneg %p88
        %p217 = pneg %p112
        %p218 = pneg %p109
        %p219 = pneg %p138
        %p220 = pneg %p135
        %s221 = sand.u32 %s125, 1
        %s222 = scalar_lea.sflag [#allocation5], %s221
        %s223 = sand.u32 %s125, 1
        %s224 = scalar_lea.vmem [#allocation6], %s223
        %p225 = scmp.lt.s32.totalorder %s23, 1
        %s226 = scalar_select %p225, %s23, 1
        %s227 = scalar_lea.vmem %s1, %s226
        %v228 = vld [vmem:[%s198] sm:$0xff]
        %v229 = vld [vmem:[%s227] sm:$0x1]
        %v230 = vld [vmem:[%s2] sm:$0x1]
        %v231 = vld [vmem:[#allocation2] sm:$0x1]
        %233 = vset.pattern.permute.xlu0 0
        %234 = vperm.xlu0 %233, %v231
        %v235 = vpop.permute.xlu0 %234
        %v237 = vlaneseq
        %v238 = vshrl.u32 %v237, 7
        %v239 = vsub.s32 0, %v238
        %v240 = vrot.slane %v235, %v239
        %vm241 = vcmask 261120
        %v243 = vsel %vm241, %v230, 0
        %v246 = vsel %vm241, %v228, 0
        %248 = vmatprep.subr.mxu0 0.0
        %249 = vmatpush1.xpose.msra.mxu0 %v246
        %250 = vmatprep.subr.mxu0 0.0
        %251 = vmatpush1.xpose.msra.mxu0 0.0
        %252 = vmatprep.subr.mxu0 0.0
        %253 = vmatpush1.xpose.msra.mxu0 0.0
        %254 = vmatprep.subr.mxu0 0.0
        %255 = vmatpush1.xpose.msra.mxu0 0.0
        %256 = vmatprep.subr.mxu0 0.0
        %257 = vmatpush1.xpose.msra.mxu0 0.0
        %258 = vmatprep.subr.mxu0 0.0
        %259 = vmatpush1.xpose.msra.mxu0 0.0
        %260 = vmatprep.subr.mxu0 0.0
        %261 = vmatpush1.xpose.msra.mxu0 0.0
        %262 = vmatprep.subr.mxu0 0.0
        %263 = vmatpush1.xpose.msra.mxu0 0.0
        %264 = vmatprep.subr.mxu0 0.0
        %265 = vmatpush1.xpose.msra.mxu0 0.0
        %266 = vmatprep.subr.mxu0 0.0
        %267 = vmatpush1.xpose.msra.mxu0 0.0
        %268 = vmatprep.subr.mxu0 0.0
        %269 = vmatpush1.xpose.msra.mxu0 0.0
        %270 = vmatprep.subr.mxu0 0.0
        %271 = vmatpush1.xpose.msra.mxu0 0.0
        %272 = vmatprep.subr.mxu0 0.0
        %273 = vmatpush1.xpose.msra.mxu0 0.0
        %274 = vmatprep.subr.mxu0 0.0
        %275 = vmatpush1.xpose.msra.mxu0 0.0
        %276 = vmatprep.subr.mxu0 0.0
        %277 = vmatpush1.xpose.msra.mxu0 0.0
        %278 = vmatprep.subr.mxu0 0.0
        %279 = vmatpush1.xpose.msra.mxu0 0.0
        %280 = vmatprep.subr.mxu0 0.0
        %281 = vmatpush1.xpose.msra.mxu0 0.0
        %282 = vmatprep.subr.mxu0 0.0
        %283 = vmatpush1.xpose.msra.mxu0 0.0
        %284 = vmatprep.subr.mxu0 0.0
        %285 = vmatpush1.xpose.msra.mxu0 0.0
        %286 = vmatprep.subr.mxu0 0.0
        %287 = vmatpush1.xpose.msra.mxu0 0.0
        %288 = vmatprep.subr.mxu0 0.0
        %289 = vmatpush1.xpose.msra.mxu0 0.0
        %290 = vmatprep.subr.mxu0 0.0
        %291 = vmatpush1.xpose.msra.mxu0 0.0
        %292 = vmatprep.subr.mxu0 0.0
        %293 = vmatpush1.xpose.msra.mxu0 0.0
        %294 = vmatprep.subr.mxu0 0.0
        %295 = vmatpush1.xpose.msra.mxu0 0.0
        %296 = vmatprep.subr.mxu0 0.0
        %297 = vmatpush1.xpose.msra.mxu0 0.0
        %298 = vmatprep.subr.mxu0 0.0
        %299 = vmatpush1.xpose.msra.mxu0 0.0
        %300 = vmatprep.subr.mxu0 0.0
        %301 = vmatpush1.xpose.msra.mxu0 0.0
        %302 = vmatprep.subr.mxu0 0.0
        %303 = vmatpush1.xpose.msra.mxu0 0.0
        %304 = vmatprep.subr.mxu0 0.0
        %305 = vmatpush1.xpose.msra.mxu0 0.0
        %306 = vmatprep.subr.mxu0 0.0
        %307 = vmatpush1.xpose.msra.mxu0 0.0
        %308 = vmatprep.subr.mxu0 0.0
        %309 = vmatpush1.xpose.msra.mxu0 0.0
        %310 = vmatprep.subr.mxu0 0.0
        %311 = vmatpush1.xpose.msra.mxu0 0.0
        %312 = vmatprep.mubr.f32.mxu0 0.0
        %313 = vmatmul.mubr.f32.gmra.mrb[0].mxu0 %v243
        %v314 = vpop.f32.mrb[0].mxu0
        %v315 = vadd.f32 %v240, %v314
        %v316 = vpop.f32.mrb[0].mxu0
        %317 = vdwg.mxu0
        %v318 = vmul.f32 %v315, %v229
        %vm319 = vcmask 57344
        %v320 = vsel %vm319, %v318, -inf
        %321 = vmax.xlane.f32.xlu0 %v320
        %v322 = vpop.xlane.xlu0 %321
        %v323 = vsub.f32 %v318, %v322
        %v324 = vmul.f32 %v323, 1.442695
        %v325 = vpow.pop %v324
        %v326 = vsel %vm319, %v325, 0.0
        %327 = vadd.xlane.f32.xlu0 %v326
        %v328 = vpop.xlane.xlu0 %327
        %v329 = vrcp.pop %v328
        %v330 = vmul.f32 %v325, %v329
        %v331 = vmul.f32 %v330, %v229
        %v332 = vsel %vm319, %v331, 0.0
        %333 = vadd.xlane.f32.xlu0 %v332
        %v334 = vpop.xlane.xlu0 %333
        %v335 = vadd.f32 %v334, 1e-13
        %v336 = vrcp.pop %v335
        %v337 = vmul.f32 %v331, %v336
        %vm338 = vcmask 64512
        %v340 = vsel %vm338, %v337, 0
        %342 = vmatprep.subr.mxu0 0.0
        %343 = vmatpush1.msra.mxu0 %v228
        %344 = vmatprep.subr.mxu0 0.0
        %345 = vmatpush1.msra.mxu0 0.0
        %346 = vmatprep.subr.mxu0 0.0
        %347 = vmatpush1.msra.mxu0 0.0
        %348 = vmatprep.subr.mxu0 0.0
        %349 = vmatpush1.msra.mxu0 0.0
        %350 = vmatprep.subr.mxu0 0.0
        %351 = vmatpush1.msra.mxu0 0.0
        %352 = vmatprep.subr.mxu0 0.0
        %353 = vmatpush1.msra.mxu0 0.0
        %354 = vmatprep.subr.mxu0 0.0
        %355 = vmatpush1.msra.mxu0 0.0
        %356 = vmatprep.subr.mxu0 0.0
        %357 = vmatpush1.msra.mxu0 0.0
        %358 = vmatprep.subr.mxu0 0.0
        %359 = vmatpush1.msra.mxu0 0.0
        %360 = vmatprep.subr.mxu0 0.0
        %361 = vmatpush1.msra.mxu0 0.0
        %362 = vmatprep.subr.mxu0 0.0
        %363 = vmatpush1.msra.mxu0 0.0
        %364 = vmatprep.subr.mxu0 0.0
        %365 = vmatpush1.msra.mxu0 0.0
        %366 = vmatprep.subr.mxu0 0.0
        %367 = vmatpush1.msra.mxu0 0.0
        %368 = vmatprep.subr.mxu0 0.0
        %369 = vmatpush1.msra.mxu0 0.0
        %370 = vmatprep.subr.mxu0 0.0
        %371 = vmatpush1.msra.mxu0 0.0
        %372 = vmatprep.subr.mxu0 0.0
        %373 = vmatpush1.msra.mxu0 0.0
        %374 = vmatprep.subr.mxu0 0.0
        %375 = vmatpush1.msra.mxu0 0.0
        %376 = vmatprep.subr.mxu0 0.0
        %377 = vmatpush1.msra.mxu0 0.0
        %378 = vmatprep.subr.mxu0 0.0
        %379 = vmatpush1.msra.mxu0 0.0
        %380 = vmatprep.subr.mxu0 0.0
        %381 = vmatpush1.msra.mxu0 0.0
        %382 = vmatprep.subr.mxu0 0.0
        %383 = vmatpush1.msra.mxu0 0.0
        %384 = vmatprep.subr.mxu0 0.0
        %385 = vmatpush1.msra.mxu0 0.0
        %386 = vmatprep.subr.mxu0 0.0
        %387 = vmatpush1.msra.mxu0 0.0
        %388 = vmatprep.subr.mxu0 0.0
        %389 = vmatpush1.msra.mxu0 0.0
        %390 = vmatprep.subr.mxu0 0.0
        %391 = vmatpush1.msra.mxu0 0.0
        %392 = vmatprep.subr.mxu0 0.0
        %393 = vmatpush1.msra.mxu0 0.0
        %394 = vmatprep.subr.mxu0 0.0
        %395 = vmatpush1.msra.mxu0 0.0
        %396 = vmatprep.subr.mxu0 0.0
        %397 = vmatpush1.msra.mxu0 0.0
        %398 = vmatprep.subr.mxu0 0.0
        %399 = vmatpush1.msra.mxu0 0.0
        %400 = vmatprep.subr.mxu0 0.0
        %401 = vmatpush1.msra.mxu0 0.0
        %402 = vmatprep.subr.mxu0 0.0
        %403 = vmatpush1.msra.mxu0 0.0
        %404 = vmatprep.subr.mxu0 0.0
        %405 = vmatpush1.msra.mxu0 0.0
        %406 = vmatprep.mubr.f32.mxu0 0.0
        %407 = vmatmul.mubr.f32.gmra.mrb[0].mxu0 %v340
        %v408 = vpop.f32.mrb[0].mxu0
        %v409 = vadd.f32 0.0, %v408
        %v410 = vpop.f32.mrb[0].mxu0
        %411 = vdwg.mxu0
        %vm412 = vcmask 253952
        %413 = vst.msk [vmem:[%s224] sm:$0x1] %vm412, %v409
        %s414 = sand.u32 %s125, 1
        %s415 = scalar_lea.sflag [#allocation5], %s414
        %s416 = sand.u32 %s125, 1
        %s417 = scalar_lea.vmem [#allocation6], %s416
        // Predicated region
        $region41: #{self_attn_aggregator.1} parent=35 // pred_check
          %p418 = pneg %p135
        $region42: #{self_attn_aggregator.1} parent=35 // pred_check_branch
          %420 = sbr.rel (%p418) target = $region44
        $region43: #{self_attn_aggregator.1} parent=35 // pred_region
          %s422 = ssub.s32 16, 16
          %423 = vsyncadd %s415, %s422
          %s424 = smul.addr %s23, 16
          %s425 = scalar_lea.hbm %s4, %s424
          %s427 = sshll.u32 %s417, 4
          %s428 = int_to_ptr.vmem [resolvable:$true] %s427
          %430 = dma.vmem_to_hbm [thread:$0]  %s428, 16, %s425, %s415
        $region44: #{self_attn_aggregator.1} parent=35 // pred_fallthru
          _
      $region36: #{self_attn_aggregator.1} parent=5 // pred_fallthru
        _
      %p431 = scmp.le.s32.totalorder 2, %s18
      // Predicated region
      $region45: #{self_attn_aggregator.1} parent=5 // pred_check
        %p432 = pneg %p431
      $region46: #{self_attn_aggregator.1} parent=5 // pred_check_branch
        %434 = sbr.rel (%p432) target = $region48
      $region47: #{self_attn_aggregator.1} parent=5 // pred_region
        %s435 = ssub.s32 %s18, 2
        // Predicated region
        $region49: #{self_attn_aggregator.1} parent=47 // pred_check
          %p436 = pneg %p141
        $region50: #{self_attn_aggregator.1} parent=47 // pred_check_branch
          %438 = sbr.rel (%p436) target = $region52
        $region51: #{self_attn_aggregator.1} parent=47 // pred_region
          %s439 = sand.u32 %s126, 1
          %s440 = scalar_lea.sflag [#allocation5], %s439
          %s441 = sand.u32 %s126, 1
          %s442 = scalar_lea.vmem [#allocation6], %s441
          %443 = dma.done %s440, 16
        $region52: #{self_attn_aggregator.1} parent=47 // pred_fallthru
          _
      $region48: #{self_attn_aggregator.1} parent=5 // pred_fallthru
        _
    $region6: #{self_attn_aggregator.1} parent=1 // loop_footer
      %s22 = sadd.s32 1, %s18
    $region7: #{self_attn_aggregator.1} parent=1 // loop_footer_branch
      %17 = sbr.rel target = $region3
    $region8: #{self_attn_aggregator.1} parent=1 // loop_exit
      _
    %444 = vsyncpa [#allocation4], 1
    %s445 = scalar_lea.sflag [#allocation4], 1
    %446 = vsyncpa %s445, 1
    %447 = vsyncpa [#allocation5], 1
    %s448 = scalar_lea.sflag [#allocation5], 1
    %449 = vsyncpa %s448, 1

</llo_original>
